<compile_context>
chip_gen: v5e
topology: v5e:2x2
jax: 0.10.0
libtpu: 0.0.40
codegen_flags: <defaults>
</compile_context>

<pallas_src>
import functools
import math

import jax
import jax.numpy as jnp
from jax import lax
from jax.experimental import pallas as pl
from jax.experimental.pallas import tpu as pltpu


def _mha_kernel(q_ref, k_ref, v_ref, wot_ref, bias_ref, out_ref, attn_ref,
                *, num_heads, d_k):
    in_dtype = q_ref.dtype
    scale = 1.0 / math.sqrt(float(d_k))

    q = q_ref[...]            # (S, d_model), lane-dense load
    k = k_ref[...]
    v = v_ref[...]

    ctx_parts = []
    for h in range(num_heads):                      # static unroll (small H)
        lo = h * d_k
        qh = q[:, lo:lo + d_k]                      # static lane slices
        kh = k[:, lo:lo + d_k]
        vh = v[:, lo:lo + d_k]

        # QK^T without materializing K^T: contract last dim with last dim.
        s = lax.dot_general(qh, kh,
                            dimension_numbers=(((1,), (1,)), ((), ())),
                            preferred_element_type=jnp.float32) * scale  # (S, S)

        # numerically-stable softmax (forward() never passes a mask)
        m = jnp.max(s, axis=-1, keepdims=True)
        e = jnp.exp(s - m)
        denom = jnp.sum(e, axis=-1, keepdims=True)
        p = e * pl.reciprocal(denom, approx=True)   # EUP slot; VALU stays free

        attn_ref[h] = p.astype(attn_ref.dtype)

        ctx_parts.append(
            jnp.dot(p.astype(in_dtype), vh,
                    preferred_element_type=jnp.float32))            # (S, d_k)

    combined = jnp.concatenate(ctx_parts, axis=-1)                  # (S, d_model)

    # Single output projection: contraction depth = d_model, W_o^T resident,
    # bias folded into the one and only output write.
    out = jnp.dot(combined.astype(wot_ref.dtype), wot_ref[...],
                  preferred_element_type=jnp.float32)               # (S, d_model)
    out_ref[...] = (out + bias_ref[...]).astype(out_ref.dtype)


def mha2_forward(Q, K, V, w_o, b_o, num_heads):
    """Pallas implementation of MHA2.forward.  Returns (output, attn)."""
    B, S, d_model = Q.shape
    assert d_model % num_heads == 0
    H = num_heads
    d_k = d_model // H

    # torch Linear weight is (out, in); pass it transposed so the kernel does
    # a plain (S, d_model) @ (d_model, d_model) matmul.
    wot = w_o.T
    bias = b_o.reshape(1, d_model)

    kernel = functools.partial(_mha_kernel, num_heads=H, d_k=d_k)

    out, attn = pl.pallas_call(
        kernel,
        out_shape=(
            jax.ShapeDtypeStruct((B, S, d_model), jnp.float32),
            jax.ShapeDtypeStruct((B, H, S, S), jnp.float32),
        ),
        grid_spec=pltpu.PrefetchScalarGridSpec(
            num_scalar_prefetch=0,
            grid=(B,),
            in_specs=[
                pl.BlockSpec((None, S, d_model), lambda b: (b, 0, 0)),  # Q
                pl.BlockSpec((None, S, d_model), lambda b: (b, 0, 0)),  # K
                pl.BlockSpec((None, S, d_model), lambda b: (b, 0, 0)),  # V
                pl.BlockSpec((d_model, d_model), lambda b: (0, 0)),     # W_o^T (resident)
                pl.BlockSpec((1, d_model), lambda b: (0, 0)),           # bias (resident)
            ],
            out_specs=[
                pl.BlockSpec((None, S, d_model), lambda b: (b, 0, 0)),
                pl.BlockSpec((None, H, S, S), lambda b: (b, 0, 0, 0)),
            ],
        ),
        compiler_params=pltpu.CompilerParams(
            dimension_semantics=("parallel",)),
    )(Q, K, V, wot, bias)

    return out, attn


def _reference(Q, K, V, w_o, b_o, num_heads):
    B, S, d_model = Q.shape
    H = num_heads
    d_k = d_model // H

    def split_heads(x):
        return x.reshape(B, S, H, d_k).transpose(0, 2, 1, 3)

    q, k, v = split_heads(Q), split_heads(K), split_heads(V)
    scores = jnp.einsum("bhqd,bhkd->bhqk", q, k) / jnp.sqrt(jnp.float32(d_k))
    p = jax.nn.softmax(scores, axis=-1)
    x = jnp.einsum("bhqk,bhkd->bhqd", p, v)
    x = x.transpose(0, 2, 1, 3).reshape(B, S, d_model)
    return x @ w_o.T + b_o, p


if __name__ == "__main__":
    B, S, d_model, H = 2, 8, 32, 4

    key = jax.random.PRNGKey(0)
    kq, kk, kv, kw, kb = jax.random.split(key, 5)

    Q = jax.random.normal(kq, (B, S, d_model), dtype=jnp.float32)
    K = jax.random.normal(kk, (B, S, d_model), dtype=jnp.float32)
    V = jax.random.normal(kv, (B, S, d_model), dtype=jnp.float32)

    # torch Linear: weight (out, in), bias (out,)
    bound = 1.0 / math.sqrt(d_model)
    w_o = jax.random.uniform(kw, (d_model, d_model), jnp.float32, -bound, bound)
    b_o = jax.random.uniform(kb, (d_model,), jnp.float32, -bound, bound)

    out, attn = mha2_forward(Q, K, V, w_o, b_o, H)
    out = jax.block_until_ready(out)
    attn = jax.block_until_ready(attn)

    out_ref, attn_ref = _reference(Q, K, V, w_o, b_o, H)
    assert jnp.allclose(out, out_ref, atol=2e-3, rtol=2e-3), "output mismatch"
    assert jnp.allclose(attn, attn_ref, atol=2e-3, rtol=2e-3), "attn mismatch"

    print("KERNEL_OK")
</pallas_src>

<mosaic_0001>
module attributes {stable_mosaic.version = 11 : i64} {
  func.func @_mha_kernel(%arg0: i32, %arg1: memref<1x8x32xf32, #tpu.memory_space<vmem>>, %arg2: memref<1x8x32xf32, #tpu.memory_space<vmem>>, %arg3: memref<1x8x32xf32, #tpu.memory_space<vmem>>, %arg4: memref<32x32xf32, #tpu.memory_space<vmem>>, %arg5: memref<1x32xf32, #tpu.memory_space<vmem>>, %arg6: memref<1x8x32xf32, #tpu.memory_space<vmem>>, %arg7: memref<1x4x8x8xf32, #tpu.memory_space<vmem>>) attributes {dimension_semantics = [#tpu.dimension_semantics<parallel>], iteration_bounds = array<i64: 2>, scalar_prefetch = 0 : i64, scratch_operands = 0 : i64, tpu.core_type = #tpu.core_type<tc>, window_params = [{transform_indices = @transform_0, window_bounds = array<i64: 1, 8, 32>}, {transform_indices = @transform_1, window_bounds = array<i64: 1, 8, 32>}, {transform_indices = @transform_2, window_bounds = array<i64: 1, 8, 32>}, {pipeline_mode = #tpu.pipeline_mode<synchronous>, transform_indices = @transform_3, window_bounds = array<i64: 32, 32>}, {pipeline_mode = #tpu.pipeline_mode<synchronous>, transform_indices = @transform_4, window_bounds = array<i64: 1, 32>}, {transform_indices = @transform_5, window_bounds = array<i64: 1, 8, 32>}, {transform_indices = @transform_6, window_bounds = array<i64: 1, 4, 8, 8>}]} {
    %c0 = arith.constant 0 : index
    %c0_0 = arith.constant 0 : index
    %c0_1 = arith.constant 0 : index
    %0 = vector.load %arg1[%c0, %c0_0, %c0_1] : memref<1x8x32xf32, #tpu.memory_space<vmem>>, vector<1x8x32xf32>
    %1 = vector.shape_cast %0 : vector<1x8x32xf32> to vector<8x32xf32>
    %c0_2 = arith.constant 0 : index
    %c0_3 = arith.constant 0 : index
    %c0_4 = arith.constant 0 : index
    %2 = vector.load %arg2[%c0_2, %c0_3, %c0_4] : memref<1x8x32xf32, #tpu.memory_space<vmem>>, vector<1x8x32xf32>
    %3 = vector.shape_cast %2 : vector<1x8x32xf32> to vector<8x32xf32>
    %c0_5 = arith.constant 0 : index
    %c0_6 = arith.constant 0 : index
    %c0_7 = arith.constant 0 : index
    %4 = vector.load %arg3[%c0_5, %c0_6, %c0_7] : memref<1x8x32xf32, #tpu.memory_space<vmem>>, vector<1x8x32xf32>
    %5 = vector.shape_cast %4 : vector<1x8x32xf32> to vector<8x32xf32>
    %6 = vector.extract_strided_slice %1 {offsets = [0, 0], sizes = [8, 8], strides = [1, 1]} : vector<8x32xf32> to vector<8x8xf32>
    %7 = vector.extract_strided_slice %3 {offsets = [0, 0], sizes = [8, 8], strides = [1, 1]} : vector<8x32xf32> to vector<8x8xf32>
    %8 = vector.extract_strided_slice %5 {offsets = [0, 0], sizes = [8, 8], strides = [1, 1]} : vector<8x32xf32> to vector<8x8xf32>
    %cst = arith.constant dense<0.000000e+00> : vector<8x8xf32>
    %9 = tpu.matmul %6, %7, %cst {dimension_numbers = #tpu.dot_dimension_numbers<[1], [1], [0], [0], [0, 0, 1, 0], [], []>} : vector<8x8xf32>, vector<8x8xf32>, vector<8x8xf32> -> vector<8x8xf32>
    %cst_8 = arith.constant 0.353553385 : f32
    %10 = vector.broadcast %cst_8 : f32 to vector<8x8xf32>
    %11 = arith.mulf %9, %10 : vector<8x8xf32>
    %cst_9 = arith.constant dense<0xFF800000> : vector<8xf32>
    %12 = vector.multi_reduction <maximumf>, %11, %cst_9 [1] : vector<8x8xf32> to vector<8xf32>
    %13 = vector.shape_cast %12 : vector<8xf32> to vector<8x1xf32>
    %14 = vector.broadcast %13 : vector<8x1xf32> to vector<8x8xf32>
    %15 = arith.subf %11, %14 : vector<8x8xf32>
    %16 = math.exp %15 : vector<8x8xf32>
    %cst_10 = arith.constant dense<0.000000e+00> : vector<8xf32>
    %17 = vector.multi_reduction <add>, %16, %cst_10 [1] : vector<8x8xf32> to vector<8xf32>
    %18 = vector.shape_cast %17 : vector<8xf32> to vector<8x1xf32>
    %19 = tpu.reciprocal %18 {approx = true} : vector<8x1xf32> -> vector<8x1xf32>
    %20 = vector.broadcast %19 : vector<8x1xf32> to vector<8x8xf32>
    %21 = arith.mulf %16, %20 : vector<8x8xf32>
    %c0_11 = arith.constant 0 : index
    %c0_12 = arith.constant 0 : index
    %c0_13 = arith.constant 0 : index
    %c0_14 = arith.constant 0 : index
    %22 = vector.load %arg7[%c0_11, %c0_12, %c0_13, %c0_14] : memref<1x4x8x8xf32, #tpu.memory_space<vmem>>, vector<1x1x8x8xf32>
    %23 = vector.shape_cast %22 : vector<1x1x8x8xf32> to vector<8x8xf32>
    %24 = vector.shape_cast %21 : vector<8x8xf32> to vector<1x1x8x8xf32>
    tpu.vector_store %arg7[%c0_11, %c0_12, %c0_13, %c0_14], %24 {strides = array<i32>} : memref<1x4x8x8xf32, #tpu.memory_space<vmem>>, vector<1x1x8x8xf32>,
    %cst_15 = arith.constant dense<0.000000e+00> : vector<8x8xf32>
    %25 = tpu.matmul %21, %8, %cst_15 {dimension_numbers = #tpu.dot_dimension_numbers<[1], [0], [0], [1], [0, 0, 1, 1], [], []>} : vector<8x8xf32>, vector<8x8xf32>, vector<8x8xf32> -> vector<8x8xf32>
    %26 = vector.extract_strided_slice %1 {offsets = [0, 8], sizes = [8, 8], strides = [1, 1]} : vector<8x32xf32> to vector<8x8xf32>
    %27 = vector.extract_strided_slice %3 {offsets = [0, 8], sizes = [8, 8], strides = [1, 1]} : vector<8x32xf32> to vector<8x8xf32>
    %28 = vector.extract_strided_slice %5 {offsets = [0, 8], sizes = [8, 8], strides = [1, 1]} : vector<8x32xf32> to vector<8x8xf32>
    %cst_16 = arith.constant dense<0.000000e+00> : vector<8x8xf32>
    %29 = tpu.matmul %26, %27, %cst_16 {dimension_numbers = #tpu.dot_dimension_numbers<[1], [1], [0], [0], [0, 0, 1, 0], [], []>} : vector<8x8xf32>, vector<8x8xf32>, vector<8x8xf32> -> vector<8x8xf32>
    %cst_17 = arith.constant 0.353553385 : f32
    %30 = vector.broadcast %cst_17 : f32 to vector<8x8xf32>
    %31 = arith.mulf %29, %30 : vector<8x8xf32>
    %cst_18 = arith.constant dense<0xFF800000> : vector<8xf32>
    %32 = vector.multi_reduction <maximumf>, %31, %cst_18 [1] : vector<8x8xf32> to vector<8xf32>
    %33 = vector.shape_cast %32 : vector<8xf32> to vector<8x1xf32>
    %34 = vector.broadcast %33 : vector<8x1xf32> to vector<8x8xf32>
    %35 = arith.subf %31, %34 : vector<8x8xf32>
    %36 = math.exp %35 : vector<8x8xf32>
    %cst_19 = arith.constant dense<0.000000e+00> : vector<8xf32>
    %37 = vector.multi_reduction <add>, %36, %cst_19 [1] : vector<8x8xf32> to vector<8xf32>
    %38 = vector.shape_cast %37 : vector<8xf32> to vector<8x1xf32>
    %39 = tpu.reciprocal %38 {approx = true} : vector<8x1xf32> -> vector<8x1xf32>
    %40 = vector.broadcast %39 : vector<8x1xf32> to vector<8x8xf32>
    %41 = arith.mulf %36, %40 : vector<8x8xf32>
    %c0_20 = arith.constant 0 : index
    %c1 = arith.constant 1 : index
    %c0_21 = arith.constant 0 : index
    %c0_22 = arith.constant 0 : index
    %42 = vector.load %arg7[%c0_20, %c1, %c0_21, %c0_22] : memref<1x4x8x8xf32, #tpu.memory_space<vmem>>, vector<1x1x8x8xf32>
    %43 = vector.shape_cast %42 : vector<1x1x8x8xf32> to vector<8x8xf32>
    %44 = vector.shape_cast %41 : vector<8x8xf32> to vector<1x1x8x8xf32>
    tpu.vector_store %arg7[%c0_20, %c1, %c0_21, %c0_22], %44 {strides = array<i32>} : memref<1x4x8x8xf32, #tpu.memory_space<vmem>>, vector<1x1x8x8xf32>,
    %cst_23 = arith.constant dense<0.000000e+00> : vector<8x8xf32>
    %45 = tpu.matmul %41, %28, %cst_23 {dimension_numbers = #tpu.dot_dimension_numbers<[1], [0], [0], [1], [0, 0, 1, 1], [], []>} : vector<8x8xf32>, vector<8x8xf32>, vector<8x8xf32> -> vector<8x8xf32>
    %46 = vector.extract_strided_slice %1 {offsets = [0, 16], sizes = [8, 8], strides = [1, 1]} : vector<8x32xf32> to vector<8x8xf32>
    %47 = vector.extract_strided_slice %3 {offsets = [0, 16], sizes = [8, 8], strides = [1, 1]} : vector<8x32xf32> to vector<8x8xf32>
    %48 = vector.extract_strided_slice %5 {offsets = [0, 16], sizes = [8, 8], strides = [1, 1]} : vector<8x32xf32> to vector<8x8xf32>
    %cst_24 = arith.constant dense<0.000000e+00> : vector<8x8xf32>
    %49 = tpu.matmul %46, %47, %cst_24 {dimension_numbers = #tpu.dot_dimension_numbers<[1], [1], [0], [0], [0, 0, 1, 0], [], []>} : vector<8x8xf32>, vector<8x8xf32>, vector<8x8xf32> -> vector<8x8xf32>
    %cst_25 = arith.constant 0.353553385 : f32
    %50 = vector.broadcast %cst_25 : f32 to vector<8x8xf32>
    %51 = arith.mulf %49, %50 : vector<8x8xf32>
    %cst_26 = arith.constant dense<0xFF800000> : vector<8xf32>
    %52 = vector.multi_reduction <maximumf>, %51, %cst_26 [1] : vector<8x8xf32> to vector<8xf32>
    %53 = vector.shape_cast %52 : vector<8xf32> to vector<8x1xf32>
    %54 = vector.broadcast %53 : vector<8x1xf32> to vector<8x8xf32>
    %55 = arith.subf %51, %54 : vector<8x8xf32>
    %56 = math.exp %55 : vector<8x8xf32>
    %cst_27 = arith.constant dense<0.000000e+00> : vector<8xf32>
    %57 = vector.multi_reduction <add>, %56, %cst_27 [1] : vector<8x8xf32> to vector<8xf32>
    %58 = vector.shape_cast %57 : vector<8xf32> to vector<8x1xf32>
    %59 = tpu.reciprocal %58 {approx = true} : vector<8x1xf32> -> vector<8x1xf32>
    %60 = vector.broadcast %59 : vector<8x1xf32> to vector<8x8xf32>
    %61 = arith.mulf %56, %60 : vector<8x8xf32>
    %c0_28 = arith.constant 0 : index
    %c2 = arith.constant 2 : index
    %c0_29 = arith.constant 0 : index
    %c0_30 = arith.constant 0 : index
    %62 = vector.load %arg7[%c0_28, %c2, %c0_29, %c0_30] : memref<1x4x8x8xf32, #tpu.memory_space<vmem>>, vector<1x1x8x8xf32>
    %63 = vector.shape_cast %62 : vector<1x1x8x8xf32> to vector<8x8xf32>
    %64 = vector.shape_cast %61 : vector<8x8xf32> to vector<1x1x8x8xf32>
    tpu.vector_store %arg7[%c0_28, %c2, %c0_29, %c0_30], %64 {strides = array<i32>} : memref<1x4x8x8xf32, #tpu.memory_space<vmem>>, vector<1x1x8x8xf32>,
    %cst_31 = arith.constant dense<0.000000e+00> : vector<8x8xf32>
    %65 = tpu.matmul %61, %48, %cst_31 {dimension_numbers = #tpu.dot_dimension_numbers<[1], [0], [0], [1], [0, 0, 1, 1], [], []>} : vector<8x8xf32>, vector<8x8xf32>, vector<8x8xf32> -> vector<8x8xf32>
    %66 = vector.extract_strided_slice %1 {offsets = [0, 24], sizes = [8, 8], strides = [1, 1]} : vector<8x32xf32> to vector<8x8xf32>
    %67 = vector.extract_strided_slice %3 {offsets = [0, 24], sizes = [8, 8], strides = [1, 1]} : vector<8x32xf32> to vector<8x8xf32>
    %68 = vector.extract_strided_slice %5 {offsets = [0, 24], sizes = [8, 8], strides = [1, 1]} : vector<8x32xf32> to vector<8x8xf32>
    %cst_32 = arith.constant dense<0.000000e+00> : vector<8x8xf32>
    %69 = tpu.matmul %66, %67, %cst_32 {dimension_numbers = #tpu.dot_dimension_numbers<[1], [1], [0], [0], [0, 0, 1, 0], [], []>} : vector<8x8xf32>, vector<8x8xf32>, vector<8x8xf32> -> vector<8x8xf32>
    %cst_33 = arith.constant 0.353553385 : f32
    %70 = vector.broadcast %cst_33 : f32 to vector<8x8xf32>
    %71 = arith.mulf %69, %70 : vector<8x8xf32>
    %cst_34 = arith.constant dense<0xFF800000> : vector<8xf32>
    %72 = vector.multi_reduction <maximumf>, %71, %cst_34 [1] : vector<8x8xf32> to vector<8xf32>
    %73 = vector.shape_cast %72 : vector<8xf32> to vector<8x1xf32>
    %74 = vector.broadcast %73 : vector<8x1xf32> to vector<8x8xf32>
    %75 = arith.subf %71, %74 : vector<8x8xf32>
    %76 = math.exp %75 : vector<8x8xf32>
    %cst_35 = arith.constant dense<0.000000e+00> : vector<8xf32>
    %77 = vector.multi_reduction <add>, %76, %cst_35 [1] : vector<8x8xf32> to vector<8xf32>
    %78 = vector.shape_cast %77 : vector<8xf32> to vector<8x1xf32>
    %79 = tpu.reciprocal %78 {approx = true} : vector<8x1xf32> -> vector<8x1xf32>
    %80 = vector.broadcast %79 : vector<8x1xf32> to vector<8x8xf32>
    %81 = arith.mulf %76, %80 : vector<8x8xf32>
    %c0_36 = arith.constant 0 : index
    %c3 = arith.constant 3 : index
    %c0_37 = arith.constant 0 : index
    %c0_38 = arith.constant 0 : index
    %82 = vector.load %arg7[%c0_36, %c3, %c0_37, %c0_38] : memref<1x4x8x8xf32, #tpu.memory_space<vmem>>, vector<1x1x8x8xf32>
    %83 = vector.shape_cast %82 : vector<1x1x8x8xf32> to vector<8x8xf32>
    %84 = vector.shape_cast %81 : vector<8x8xf32> to vector<1x1x8x8xf32>
    tpu.vector_store %arg7[%c0_36, %c3, %c0_37, %c0_38], %84 {strides = array<i32>} : memref<1x4x8x8xf32, #tpu.memory_space<vmem>>, vector<1x1x8x8xf32>,
    %cst_39 = arith.constant dense<0.000000e+00> : vector<8x8xf32>
    %85 = tpu.matmul %81, %68, %cst_39 {dimension_numbers = #tpu.dot_dimension_numbers<[1], [0], [0], [1], [0, 0, 1, 1], [], []>} : vector<8x8xf32>, vector<8x8xf32>, vector<8x8xf32> -> vector<8x8xf32>
    %86 = tpu.concatenate %25, %45, %65, %85 in 1 : vector<8x8xf32>, vector<8x8xf32>, vector<8x8xf32>, vector<8x8xf32> -> vector<8x32xf32>
    %c0_40 = arith.constant 0 : index
    %c0_41 = arith.constant 0 : index
    %87 = vector.load %arg4[%c0_40, %c0_41] : memref<32x32xf32, #tpu.memory_space<vmem>>, vector<32x32xf32>
    %cst_42 = arith.constant dense<0.000000e+00> : vector<8x32xf32>
    %88 = tpu.matmul %86, %87, %cst_42 {dimension_numbers = #tpu.dot_dimension_numbers<[1], [0], [0], [1], [0, 0, 1, 1], [], []>} : vector<8x32xf32>, vector<32x32xf32>, vector<8x32xf32> -> vector<8x32xf32>
    %c0_43 = arith.constant 0 : index
    %c0_44 = arith.constant 0 : index
    %89 = vector.load %arg5[%c0_43, %c0_44] : memref<1x32xf32, #tpu.memory_space<vmem>>, vector<1x32xf32>
    %90 = vector.broadcast %89 : vector<1x32xf32> to vector<8x32xf32>
    %91 = arith.addf %88, %90 : vector<8x32xf32>
    %c0_45 = arith.constant 0 : index
    %c0_46 = arith.constant 0 : index
    %c0_47 = arith.constant 0 : index
    %92 = vector.load %arg6[%c0_45, %c0_46, %c0_47] : memref<1x8x32xf32, #tpu.memory_space<vmem>>, vector<1x8x32xf32>
    %93 = vector.shape_cast %92 : vector<1x8x32xf32> to vector<8x32xf32>
    %94 = vector.shape_cast %91 : vector<8x32xf32> to vector<1x8x32xf32>
    tpu.vector_store %arg6[%c0_45, %c0_46, %c0_47], %94 {strides = array<i32>} : memref<1x8x32xf32, #tpu.memory_space<vmem>>, vector<1x8x32xf32>,
    return
  }
  func.func @transform_0(%arg0: i32) -> (i32, i32, i32) {
    %c0_i32 = arith.constant 0 : i32
    %c0_i32_0 = arith.constant 0 : i32
    %c0_i32_1 = arith.constant 0 : i32
    return %arg0, %c0_i32, %c0_i32_0 : i32, i32, i32
  }
  func.func @transform_1(%arg0: i32) -> (i32, i32, i32) {
    %c0_i32 = arith.constant 0 : i32
    %c0_i32_0 = arith.constant 0 : i32
    %c0_i32_1 = arith.constant 0 : i32
    return %arg0, %c0_i32, %c0_i32_0 : i32, i32, i32
  }
  func.func @transform_2(%arg0: i32) -> (i32, i32, i32) {
    %c0_i32 = arith.constant 0 : i32
    %c0_i32_0 = arith.constant 0 : i32
    %c0_i32_1 = arith.constant 0 : i32
    return %arg0, %c0_i32, %c0_i32_0 : i32, i32, i32
  }
  func.func @transform_3(%arg0: i32) -> (i32, i32) {
    %c0_i32 = arith.constant 0 : i32
    %c0_i32_0 = arith.constant 0 : i32
    %c0_i32_1 = arith.constant 0 : i32
    return %c0_i32, %c0_i32_0 : i32, i32
  }
  func.func @transform_4(%arg0: i32) -> (i32, i32) {
    %c0_i32 = arith.constant 0 : i32
    %c0_i32_0 = arith.constant 0 : i32
    %c0_i32_1 = arith.constant 0 : i32
    return %c0_i32, %c0_i32_0 : i32, i32
  }
  func.func @transform_5(%arg0: i32) -> (i32, i32, i32) {
    %c0_i32 = arith.constant 0 : i32
    %c0_i32_0 = arith.constant 0 : i32
    %c0_i32_1 = arith.constant 0 : i32
    return %arg0, %c0_i32, %c0_i32_0 : i32, i32, i32
  }
  func.func @transform_6(%arg0: i32) -> (i32, i32, i32, i32) {
    %c0_i32 = arith.constant 0 : i32
    %c0_i32_0 = arith.constant 0 : i32
    %c0_i32_1 = arith.constant 0 : i32
    %c0_i32_2 = arith.constant 0 : i32
    return %arg0, %c0_i32, %c0_i32_0, %c0_i32_1 : i32, i32, i32, i32
  }
}

</mosaic_0001>

<llo_original>
// kernel: tpu_custom_call.1
$region0: #{tpu_custom_call.1}
  #allocation0 [shape = 'u32[]', space=smem, size = 0x4, offset = 0x4, fixed_abs, tag = 'smem constant byte address 0x4 - core index']
  #allocation1 [shape = 'u32[72,128]{1,0:T(1,128)}', space=vmem, size = 0x9000, scoped, tag = 'internal scratch']
  %s0 = inlined_call_operand.hbm [shape: f32[2,8,32], index: 0, kind: input, shape index: {}]
  %s1 = inlined_call_operand.hbm [shape: f32[2,8,32], index: 1, kind: input, shape index: {}]
  %s2 = inlined_call_operand.hbm [shape: f32[2,8,32], index: 2, kind: input, shape index: {}]
  %s3 = inlined_call_operand.hbm [shape: f32[32,32], index: 3, kind: input, shape index: {}]
  %s4 = inlined_call_operand.vmem [shape: f32[1,32], index: 4, kind: input, shape index: {}]
  %s5 = inlined_call_operand.hbm [shape: f32[2,8,32], index: 5, kind: output, shape index: {0}]
  %s6 = inlined_call_operand.hbm [shape: f32[2,4,8,8], index: 6, kind: output, shape index: {1}]
  %7 = xla_tuple %s5, %s6
  %s8 = sld [smem:[#allocation0]]
  $region77: #{tpu_custom_call.1} parent=0
    _
  %s10 = ssub.s32 1, %s8
  %s11 = scalar_select 0, %s10, %s8
  $region1: #{tpu_custom_call.1} parent=0
    #allocation2 [shape = 'u8[8192]{0}', space=vmem, size = 0x2000, scoped, tag = 'input window, operand 0']
    #allocation3 [shape = 's32[2]{0}', space=sflag, size = 0x8, scoped, tag = 'scoped memory for tpu_custom_call.1']
    #allocation4 [shape = 's32[2]{0}', space=sflag, size = 0x8, scoped, tag = 'scoped memory for tpu_custom_call.1']
    #allocation5 [shape = 'u8[8192]{0}', space=vmem, size = 0x2000, scoped, tag = 'input window, operand 1']
    #allocation6 [shape = 's32[2]{0}', space=sflag, size = 0x8, scoped, tag = 'scoped memory for tpu_custom_call.1']
    #allocation7 [shape = 'u8[8192]{0}', space=vmem, size = 0x2000, scoped, tag = 'input window, operand 2']
    #allocation8 [shape = 'u8[16384]{0}', space=vmem, size = 0x4000, scoped, tag = 'input window, operand 3, single buffered']
    #allocation9 [shape = 's32[1]{0}', space=sflag, size = 0x4, scoped, tag = 'scoped memory for tpu_custom_call.1']
    #allocation10 [shape = 'u8[8192]{0}', space=vmem, size = 0x2000, scoped, tag = 'output window, operand 0']
    #allocation11 [shape = 'u8[32768]{0}', space=vmem, size = 0x8000, scoped, tag = 'output window, operand 1']
    #allocation12 [shape = 's32[2]{0}', space=sflag, size = 0x8, scoped, tag = 'scoped memory for tpu_custom_call.1']
    %12 = vsyncpa [#allocation3], 0
    %s13 = scalar_lea.sflag [#allocation3], 1
    %14 = vsyncpa %s13, 0
    %15 = vsyncpa [#allocation6], 0
    %s16 = scalar_lea.sflag [#allocation6], 1
    %17 = vsyncpa %s16, 0
    %18 = vsyncpa [#allocation9], 0
    %19 = vsyncpa [#allocation4], 0
    %s20 = scalar_lea.sflag [#allocation4], 1
    %21 = vsyncpa %s20, 0
    %22 = vsyncpa [#allocation12], 0
    %s23 = scalar_lea.sflag [#allocation12], 1
    %24 = vsyncpa %s23, 0
    loop: start=0, step=1, limit=4
    $region2: #{tpu_custom_call.1} parent=1 // loop_pre_header
      _
    $region3: #{tpu_custom_call.1} parent=1 // loop_header
      %s26 = sphi 0, %s30
      %p27 = scmp.ge.s32.totalorder %s26, 4
      %s36 = sphi 0, %s38
      %s39 = sphi 0, %s36
      %s40 = sphi 0, %s39
      %s56 = sphi 0, %s40
      %s62 = sphi 0, %s64
      %s65 = sphi 0, %s62
      %s66 = sphi 0, %s65
      %s82 = sphi 0, %s66
      %s88 = sphi 0, %s90
      %s91 = sphi 0, %s88
      %s92 = sphi 0, %s91
      %s108 = sphi 0, %s92
      %s112 = sphi 0, %s112
      %s114 = sphi 0, %s112
      %s115 = sphi 0, %s114
      %s129 = sphi 0, %s115
      %s133 = sphi 0, %s133
      %s135 = sphi 0, %s133
      %s136 = sphi 0, %s135
      %s150 = sphi 0, %s136
      %s156 = sphi 0, %s158
      %s159 = sphi 0, %s156
      %s160 = sphi 0, %s159
      %s176 = sphi 0, %s160
      %s182 = sphi 0, %s184
      %s185 = sphi 0, %s182
      %s186 = sphi 0, %s185
      %s202 = sphi 0, %s186
    $region4: #{tpu_custom_call.1} parent=1 // loop_header_branch
      %29 = sbr.rel (%p27) target = $region8
    $region5: #{tpu_custom_call.1} parent=1 // loop_body
      %s31 = ssub.s32 %s26, 1
      %s32 = ssub.s32 %s26, 2
      %s33 = sadd.s32 %s26, 1
      %s34 = ssub.s32 %s26, %s33
      %p35 = scmp.eq.s32.totalorder %s34, 0
      %s37 = sadd.s32 %s36, 1
      %s38 = scalar_select %p35, %s36, %s37
      %p41 = pneg %p35
      %p42 = scmp.eq.s32.totalorder %s26, 1
      %p43 = por %p41, %p42
      %p44 = scmp.ne.s32.totalorder %s36, %s39
      %p45 = scmp.eq.s32.totalorder %s26, 0
      %p46 = por %p44, %p45
      %p47 = scmp.ne.s32.totalorder %s36, %s39
      %p48 = scmp.eq.s32.totalorder %s31, 1
      %p49 = por %p47, %p48
      %p50 = scmp.ne.s32.totalorder %s39, %s40
      %p51 = scmp.eq.s32.totalorder %s31, 0
      %p52 = por %p50, %p51
      %p53 = scmp.ne.s32.totalorder %s39, %s40
      %p54 = scmp.eq.s32.totalorder %s32, 1
      %p55 = por %p53, %p54
      %p57 = scmp.ne.s32.totalorder %s40, %s56
      %p58 = scmp.eq.s32.totalorder %s32, 0
      %p59 = por %p57, %p58
      %s60 = ssub.s32 %s26, %s33
      %p61 = scmp.eq.s32.totalorder %s60, 0
      %s63 = sadd.s32 %s62, 1
      %s64 = scalar_select %p61, %s62, %s63
      %p67 = pneg %p61
      %p68 = scmp.eq.s32.totalorder %s26, 1
      %p69 = por %p67, %p68
      %p70 = scmp.ne.s32.totalorder %s62, %s65
      %p71 = scmp.eq.s32.totalorder %s26, 0
      %p72 = por %p70, %p71
      %p73 = scmp.ne.s32.totalorder %s62, %s65
      %p74 = scmp.eq.s32.totalorder %s31, 1
      %p75 = por %p73, %p74
      %p76 = scmp.ne.s32.totalorder %s65, %s66
      %p77 = scmp.eq.s32.totalorder %s31, 0
      %p78 = por %p76, %p77
      %p79 = scmp.ne.s32.totalorder %s65, %s66
      %p80 = scmp.eq.s32.totalorder %s32, 1
      %p81 = por %p79, %p80
      %p83 = scmp.ne.s32.totalorder %s66, %s82
      %p84 = scmp.eq.s32.totalorder %s32, 0
      %p85 = por %p83, %p84
      %s86 = ssub.s32 %s26, %s33
      %p87 = scmp.eq.s32.totalorder %s86, 0
      %s89 = sadd.s32 %s88, 1
      %s90 = scalar_select %p87, %s88, %s89
      %p93 = pneg %p87
      %p94 = scmp.eq.s32.totalorder %s26, 1
      %p95 = por %p93, %p94
      %p96 = scmp.ne.s32.totalorder %s88, %s91
      %p97 = scmp.eq.s32.totalorder %s26, 0
      %p98 = por %p96, %p97
      %p99 = scmp.ne.s32.totalorder %s88, %s91
      %p100 = scmp.eq.s32.totalorder %s31, 1
      %p101 = por %p99, %p100
      %p102 = scmp.ne.s32.totalorder %s91, %s92
      %p103 = scmp.eq.s32.totalorder %s31, 0
      %p104 = por %p102, %p103
      %p105 = scmp.ne.s32.totalorder %s91, %s92
      %p106 = scmp.eq.s32.totalorder %s32, 1
      %p107 = por %p105, %p106
      %p109 = scmp.ne.s32.totalorder %s92, %s108
      %p110 = scmp.eq.s32.totalorder %s32, 0
      %p111 = por %p109, %p110
      %s113 = sadd.s32 %s112, 1
      %p116 = scmp.eq.s32.totalorder %s26, 1
      %p117 = scmp.ne.s32.totalorder %s112, %s114
      %p118 = scmp.eq.s32.totalorder %s26, 0
      %p119 = por %p117, %p118
      %p120 = scmp.ne.s32.totalorder %s112, %s114
      %p121 = scmp.eq.s32.totalorder %s31, 1
      %p122 = por %p120, %p121
      %p123 = scmp.ne.s32.totalorder %s114, %s115
      %p124 = scmp.eq.s32.totalorder %s31, 0
      %p125 = por %p123, %p124
      %p126 = scmp.ne.s32.totalorder %s114, %s115
      %p127 = scmp.eq.s32.totalorder %s32, 1
      %p128 = por %p126, %p127
      %p130 = scmp.ne.s32.totalorder %s115, %s129
      %p131 = scmp.eq.s32.totalorder %s32, 0
      %p132 = por %p130, %p131
      %s134 = sadd.s32 %s133, 1
      %p137 = scmp.eq.s32.totalorder %s26, 1
      %p138 = scmp.ne.s32.totalorder %s133, %s135
      %p139 = scmp.eq.s32.totalorder %s26, 0
      %p140 = por %p138, %p139
      %p141 = scmp.ne.s32.totalorder %s133, %s135
      %p142 = scmp.eq.s32.totalorder %s31, 1
      %p143 = por %p141, %p142
      %p144 = scmp.ne.s32.totalorder %s135, %s136
      %p145 = scmp.eq.s32.totalorder %s31, 0
      %p146 = por %p144, %p145
      %p147 = scmp.ne.s32.totalorder %s135, %s136
      %p148 = scmp.eq.s32.totalorder %s32, 1
      %p149 = por %p147, %p148
      %p151 = scmp.ne.s32.totalorder %s136, %s150
      %p152 = scmp.eq.s32.totalorder %s32, 0
      %p153 = por %p151, %p152
      %s154 = ssub.s32 %s26, %s33
      %p155 = scmp.eq.s32.totalorder %s154, 0
      %s157 = sadd.s32 %s156, 1
      %s158 = scalar_select %p155, %s156, %s157
      %p161 = pneg %p155
      %p162 = scmp.eq.s32.totalorder %s26, 1
      %p163 = por %p161, %p162
      %p164 = scmp.ne.s32.totalorder %s156, %s159
      %p165 = scmp.eq.s32.totalorder %s26, 0
      %p166 = por %p164, %p165
      %p167 = scmp.ne.s32.totalorder %s156, %s159
      %p168 = scmp.eq.s32.totalorder %s31, 1
      %p169 = por %p167, %p168
      %p170 = scmp.ne.s32.totalorder %s159, %s160
      %p171 = scmp.eq.s32.totalorder %s31, 0
      %p172 = por %p170, %p171
      %p173 = scmp.ne.s32.totalorder %s159, %s160
      %p174 = scmp.eq.s32.totalorder %s32, 1
      %p175 = por %p173, %p174
      %p177 = scmp.ne.s32.totalorder %s160, %s176
      %p178 = scmp.eq.s32.totalorder %s32, 0
      %p179 = por %p177, %p178
      %s180 = ssub.s32 %s26, %s33
      %p181 = scmp.eq.s32.totalorder %s180, 0
      %s183 = sadd.s32 %s182, 1
      %s184 = scalar_select %p181, %s182, %s183
      %p187 = pneg %p181
      %p188 = scmp.eq.s32.totalorder %s26, 1
      %p189 = por %p187, %p188
      %p190 = scmp.ne.s32.totalorder %s182, %s185
      %p191 = scmp.eq.s32.totalorder %s26, 0
      %p192 = por %p190, %p191
      %p193 = scmp.ne.s32.totalorder %s182, %s185
      %p194 = scmp.eq.s32.totalorder %s31, 1
      %p195 = por %p193, %p194
      %p196 = scmp.ne.s32.totalorder %s185, %s186
      %p197 = scmp.eq.s32.totalorder %s31, 0
      %p198 = por %p196, %p197
      %p199 = scmp.ne.s32.totalorder %s185, %s186
      %p200 = scmp.eq.s32.totalorder %s32, 1
      %p201 = por %p199, %p200
      %p203 = scmp.ne.s32.totalorder %s186, %s202
      %p204 = scmp.eq.s32.totalorder %s32, 0
      %p205 = por %p203, %p204
      %p206 = scmp.le.s32.totalorder 1, %s26
      %p207 = scmp.lt.s32.totalorder %s26, 3
      %p208 = pnand %p206, %p207
      %p209 = pneg %p208
      // Predicated region
      $region9: #{tpu_custom_call.1} parent=5 // pred_check
        _
      $region10: #{tpu_custom_call.1} parent=5 // pred_check_branch
        %211 = sbr.rel (%p208) target = $region12
      $region11: #{tpu_custom_call.1} parent=5 // pred_region
        %s212 = ssub.s32 %s26, 1
        // Predicated region
        $region13: #{tpu_custom_call.1} parent=11 // pred_check
          %p213 = pneg %p125
        $region14: #{tpu_custom_call.1} parent=11 // pred_check_branch
          %215 = sbr.rel (%p213) target = $region16
        $region15: #{tpu_custom_call.1} parent=11 // pred_region
          %217 = vsyncadd [#allocation9], 0
          %s218 = sshll.u32 %s3, 4
          %s219 = int_to_ptr.hbm [resolvable:$true] %s218
          %s220 = sshll.u32 [#allocation8], 4
          %s221 = int_to_ptr.vmem [resolvable:$true] %s220
          %226 = dma.hbm_to_vmem [thread:$0]  %s219, 512, %s221, [#allocation9], 128, 128, 8
        $region16: #{tpu_custom_call.1} parent=11 // pred_fallthru
          _
        // Predicated region
        $region17: #{tpu_custom_call.1} parent=11 // pred_check
          %p227 = pneg %p146
        $region18: #{tpu_custom_call.1} parent=11 // pred_check_branch
          %229 = sbr.rel (%p227) target = $region20
        $region19: #{tpu_custom_call.1} parent=11 // pred_region
          _
        $region20: #{tpu_custom_call.1} parent=11 // pred_fallthru
          _
      $region12: #{tpu_custom_call.1} parent=5 // pred_fallthru
        _
      %p230 = scmp.lt.s32.totalorder %s26, 2
      // Predicated region
      $region21: #{tpu_custom_call.1} parent=5 // pred_check
        %p231 = pneg %p230
      $region22: #{tpu_custom_call.1} parent=5 // pred_check_branch
        %233 = sbr.rel (%p231) target = $region24
      $region23: #{tpu_custom_call.1} parent=5 // pred_region
        // Predicated region
        $region25: #{tpu_custom_call.1} parent=23 // pred_check
          %p234 = pneg %p46
        $region26: #{tpu_custom_call.1} parent=23 // pred_check_branch
          %236 = sbr.rel (%p234) target = $region28
        $region27: #{tpu_custom_call.1} parent=23 // pred_region
          %s237 = sand.u32 %s36, 1
          %s238 = scalar_lea.sflag [#allocation3], %s237
          %s239 = sand.u32 %s36, 1
          %s240 = smul.addr %s239, 8
          %s241 = scalar_lea.vmem [#allocation2], %s240
          %243 = vsyncadd %s238, 0
          %s244 = smul.addr %s26, 8
          %s245 = scalar_lea.hbm %s0, %s244
          %s247 = sshll.u32 %s245, 4
          %s248 = int_to_ptr.hbm [resolvable:$true] %s247
          %s249 = sshll.u32 %s241, 4
          %s250 = int_to_ptr.vmem [resolvable:$true] %s249
          %252 = dma.hbm_to_vmem [thread:$0]  %s248, 128, %s250, %s238
        $region28: #{tpu_custom_call.1} parent=23 // pred_fallthru
          _
        // Predicated region
        $region29: #{tpu_custom_call.1} parent=23 // pred_check
          %p253 = pneg %p72
        $region30: #{tpu_custom_call.1} parent=23 // pred_check_branch
          %255 = sbr.rel (%p253) target = $region32
        $region31: #{tpu_custom_call.1} parent=23 // pred_region
          %s256 = sand.u32 %s26, 1
          %s257 = scalar_lea.sflag [#allocation6], %s256
          %s258 = sand.u32 %s62, 1
          %s259 = smul.addr %s258, 8
          %s260 = scalar_lea.vmem [#allocation5], %s259
          %262 = vsyncadd %s257, 0
          %s263 = smul.addr %s26, 8
          %s264 = scalar_lea.hbm %s1, %s263
          %s266 = sshll.u32 %s264, 4
          %s267 = int_to_ptr.hbm [resolvable:$true] %s266
          %s268 = sshll.u32 %s260, 4
          %s269 = int_to_ptr.vmem [resolvable:$true] %s268
          %271 = dma.hbm_to_vmem [thread:$0]  %s267, 128, %s269, %s257
        $region32: #{tpu_custom_call.1} parent=23 // pred_fallthru
          _
        // Predicated region
        $region33: #{tpu_custom_call.1} parent=23 // pred_check
          %p272 = pneg %p98
        $region34: #{tpu_custom_call.1} parent=23 // pred_check_branch
          %274 = sbr.rel (%p272) target = $region36
        $region35: #{tpu_custom_call.1} parent=23 // pred_region
          %s275 = sand.u32 %s26, 1
          %s276 = scalar_lea.sflag [#allocation6], %s275
          %s277 = sand.u32 %s88, 1
          %s278 = smul.addr %s277, 8
          %s279 = scalar_lea.vmem [#allocation7], %s278
          %281 = vsyncadd %s276, 0
          %s282 = smul.addr %s26, 8
          %s283 = scalar_lea.hbm %s2, %s282
          %s285 = sshll.u32 %s283, 4
          %s286 = int_to_ptr.hbm [resolvable:$true] %s285
          %s287 = sshll.u32 %s279, 4
          %s288 = int_to_ptr.vmem [resolvable:$true] %s287
          %290 = dma.hbm_to_vmem [thread:$0]  %s286, 128, %s288, %s276
        $region36: #{tpu_custom_call.1} parent=23 // pred_fallthru
          _
      $region24: #{tpu_custom_call.1} parent=5 // pred_fallthru
        _
      %p291 = scmp.le.s32.totalorder 1, %s26
      %p292 = scmp.lt.s32.totalorder %s26, 3
      %p293 = pnand %p291, %p292
      %p294 = pneg %p293
      // Predicated region
      $region37: #{tpu_custom_call.1} parent=5 // pred_check
        _
      $region38: #{tpu_custom_call.1} parent=5 // pred_check_branch
        %296 = sbr.rel (%p293) target = $region40
      $region39: #{tpu_custom_call.1} parent=5 // pred_region
        %s297 = ssub.s32 %s26, 1
        %s298 = sand.u32 %s39, 1
        %s299 = scalar_lea.sflag [#allocation3], %s298
        %s300 = sand.u32 %s39, 1
        %s301 = smul.addr %s300, 8
        %s302 = scalar_lea.vmem [#allocation2], %s301
        // Predicated region
        $region41: #{tpu_custom_call.1} parent=39 // pred_check
          %p303 = pneg %p52
        $region42: #{tpu_custom_call.1} parent=39 // pred_check_branch
          %305 = sbr.rel (%p303) target = $region44
        $region43: #{tpu_custom_call.1} parent=39 // pred_region
          %307 = dma.done %s299, 128
        $region44: #{tpu_custom_call.1} parent=39 // pred_fallthru
          _
        %s308 = sand.u32 %s31, 1
        %s309 = scalar_lea.sflag [#allocation6], %s308
        %s310 = sand.u32 %s65, 1
        %s311 = smul.addr %s310, 8
        %s312 = scalar_lea.vmem [#allocation5], %s311
        // Predicated region
        $region45: #{tpu_custom_call.1} parent=39 // pred_check
          %p313 = pneg %p78
        $region46: #{tpu_custom_call.1} parent=39 // pred_check_branch
          %315 = sbr.rel (%p313) target = $region48
        $region47: #{tpu_custom_call.1} parent=39 // pred_region
          %317 = dma.done %s309, 128
        $region48: #{tpu_custom_call.1} parent=39 // pred_fallthru
          _
        %s318 = sand.u32 %s31, 1
        %s319 = scalar_lea.sflag [#allocation6], %s318
        %s320 = sand.u32 %s91, 1
        %s321 = smul.addr %s320, 8
        %s322 = scalar_lea.vmem [#allocation7], %s321
        // Predicated region
        $region49: #{tpu_custom_call.1} parent=39 // pred_check
          %p323 = pneg %p104
        $region50: #{tpu_custom_call.1} parent=39 // pred_check_branch
          %325 = sbr.rel (%p323) target = $region52
        $region51: #{tpu_custom_call.1} parent=39 // pred_region
          %327 = dma.done %s319, 128
        $region52: #{tpu_custom_call.1} parent=39 // pred_fallthru
          _
        // Predicated region
        $region53: #{tpu_custom_call.1} parent=39 // pred_check
          %p328 = pneg %p125
        $region54: #{tpu_custom_call.1} parent=39 // pred_check_branch
          %330 = sbr.rel (%p328) target = $region56
        $region55: #{tpu_custom_call.1} parent=39 // pred_region
          %332 = dma.done [#allocation9], 512
        $region56: #{tpu_custom_call.1} parent=39 // pred_fallthru
          _
        %s333 = sand.u32 %s39, 1
        %s334 = scalar_lea.sflag [#allocation3], %s333
        %s335 = sand.u32 %s39, 1
        %s336 = smul.addr %s335, 8
        %s337 = scalar_lea.vmem [#allocation2], %s336
        %p338 = pneg %p52
        %p339 = pneg %p49
        %s340 = sand.u32 %s31, 1
        %s341 = scalar_lea.sflag [#allocation6], %s340
        %s342 = sand.u32 %s65, 1
        %s343 = smul.addr %s342, 8
        %s344 = scalar_lea.vmem [#allocation5], %s343
        %p345 = pneg %p78
        %p346 = pneg %p75
        %s347 = sand.u32 %s31, 1
        %s348 = scalar_lea.sflag [#allocation6], %s347
        %s349 = sand.u32 %s91, 1
        %s350 = smul.addr %s349, 8
        %s351 = scalar_lea.vmem [#allocation7], %s350
        %p352 = pneg %p104
        %p353 = pneg %p101
        %p354 = pneg %p125
        %p355 = pneg %p122
        %p356 = pneg %p146
        %p357 = pneg %p143
        %p358 = pneg %p172
        %p359 = pneg %p169
        %s360 = sand.u32 %s159, 1
        %s361 = scalar_lea.sflag [#allocation4], %s360
        %s362 = sand.u32 %s159, 1
        %s363 = smul.addr %s362, 8
        %s364 = scalar_lea.vmem [#allocation10], %s363
        %p365 = pneg %p198
        %p366 = pneg %p195
        %s367 = sand.u32 %s185, 1
        %s368 = scalar_lea.sflag [#allocation12], %s367
        %s369 = sand.u32 %s185, 1
        %s370 = smul.addr %s369, 32
        %s371 = scalar_lea.vmem [#allocation11], %s370
        %v372 = vld [vmem:[%s302] sm:$0xff]
        %v373 = vld [vmem:[%s312] sm:$0xff]
        %v374 = vld [vmem:[%s322] sm:$0xff]
        %vm375 = vcmask 64512
        %v377 = vsel %vm375, %v372, 0
        %v380 = vsel %vm375, %v373, 0
        %382 = vmatpush.xpose.msra.mxu0 0.0
        %383 = vmatpush.xpose.msra.mxu0 0.0
        %384 = vmatpush.xpose.msra.mxu0 0.0
        %385 = vmatpush.xpose.msra.mxu0 0.0
        %386 = vmatpush.xpose.msra.mxu0 0.0
        %387 = vmatpush.xpose.msra.mxu0 0.0
        %388 = vmatpush.xpose.msra.mxu0 0.0
        %389 = vmatpush.xpose.msra.mxu0 0.0
        %390 = vmatpush.xpose.msra.mxu0 0.0
        %391 = vmatpush.xpose.msra.mxu0 0.0
        %392 = vmatpush.xpose.msra.mxu0 0.0
        %393 = vmatpush.xpose.msra.mxu0 0.0
        %394 = vmatpush.xpose.msra.mxu0 0.0
        %395 = vmatpush.xpose.msra.mxu0 0.0
        %396 = vmatpush.xpose.msra.mxu0 0.0
        %397 = vmatpush.xpose.msra.mxu0 %v380
        %398 = vmatmul.f32.gmra.mxu0 %v377
        %v399 = vpop.f32.mrf.mxu0
        %v400 = vadd.f32 0.0, %v399
        %401 = vdwg.mxu0
        %v402 = vmul.f32 %v400, 0.35355338
        %v403 = vsel %vm375, %v402, -inf
        %404 = vmax.xlane.f32.xlu0 %v403
        %v405 = vpop.xlane.xlu0 %404
        %v406 = vsub.f32 %v402, %v405
        %v407 = vmul.f32 %v406, 1.442695
        %v408 = vpow.pop %v407
        %v409 = vsel %vm375, %v408, 0.0
        %410 = vadd.xlane.f32.xlu0 %v409
        %v411 = vpop.xlane.xlu0 %410
        %v412 = vrcp.pop %v411
        %v413 = vmul.f32 %v408, %v412
        %414 = vst.msk [vmem:[%s371] sm:$0xff] %vm375, %v413
        %v416 = vsel %vm375, %v413, 0
        %418 = vmatpush.msra.mxu0 0.0
        %419 = vmatpush.msra.mxu0 0.0
        %420 = vmatpush.msra.mxu0 0.0
        %421 = vmatpush.msra.mxu0 0.0
        %422 = vmatpush.msra.mxu0 0.0
        %423 = vmatpush.msra.mxu0 0.0
        %424 = vmatpush.msra.mxu0 0.0
        %425 = vmatpush.msra.mxu0 0.0
        %426 = vmatpush.msra.mxu0 0.0
        %427 = vmatpush.msra.mxu0 0.0
        %428 = vmatpush.msra.mxu0 0.0
        %429 = vmatpush.msra.mxu0 0.0
        %430 = vmatpush.msra.mxu0 0.0
        %431 = vmatpush.msra.mxu0 0.0
        %432 = vmatpush.msra.mxu0 0.0
        %433 = vmatpush.msra.mxu0 %v374
        %434 = vmatmul.f32.gmra.mxu0 %v416
        %v435 = vpop.f32.mrf.mxu0
        %v436 = vadd.f32 0.0, %v435
        %437 = vdwg.mxu0
        %438 = vrot.lane.b32.xlu0 %v372, 120
        %v439 = vpop.permute.xlu0 %438
        %440 = vrot.lane.b32.xlu0 %v373, 120
        %v441 = vpop.permute.xlu0 %440
        %v442 = vsel %vm375, %v439, 0
        %v444 = vsel %vm375, %v441, 0
        %446 = vmatpush.xpose.msra.mxu0 0.0
        %447 = vmatpush.xpose.msra.mxu0 0.0
        %448 = vmatpush.xpose.msra.mxu0 0.0
        %449 = vmatpush.xpose.msra.mxu0 0.0
        %450 = vmatpush.xpose.msra.mxu0 0.0
        %451 = vmatpush.xpose.msra.mxu0 0.0
        %452 = vmatpush.xpose.msra.mxu0 0.0
        %453 = vmatpush.xpose.msra.mxu0 0.0
        %454 = vmatpush.xpose.msra.mxu0 0.0
        %455 = vmatpush.xpose.msra.mxu0 0.0
        %456 = vmatpush.xpose.msra.mxu0 0.0
        %457 = vmatpush.xpose.msra.mxu0 0.0
        %458 = vmatpush.xpose.msra.mxu0 0.0
        %459 = vmatpush.xpose.msra.mxu0 0.0
        %460 = vmatpush.xpose.msra.mxu0 0.0
        %461 = vmatpush.xpose.msra.mxu0 %v444
        %462 = vmatmul.f32.gmra.mxu0 %v442
        %v463 = vpop.f32.mrf.mxu0
        %v464 = vadd.f32 0.0, %v463
        %465 = vdwg.mxu0
        %v466 = vmul.f32 %v464, 0.35355338
        %v467 = vsel %vm375, %v466, -inf
        %468 = vmax.xlane.f32.xlu0 %v467
        %v469 = vpop.xlane.xlu0 %468
        %v470 = vsub.f32 %v466, %v469
        %v471 = vmul.f32 %v470, 1.442695
        %v472 = vpow.pop %v471
        %v473 = vsel %vm375, %v472, 0.0
        %474 = vadd.xlane.f32.xlu0 %v473
        %v475 = vpop.xlane.xlu0 %474
        %v476 = vrcp.pop %v475
        %v477 = vmul.f32 %v472, %v476
        %s478 = scalar_lea.vmem %s371, 8 [#allocation11]
        %479 = vst.msk [vmem:[%s478] sm:$0xff] %vm375, %v477
        %481 = vrot.lane.b32.xlu0 %v374, 120
        %v482 = vpop.permute.xlu0 %481
        %v485 = vsel %vm375, %v477, 0
        %487 = vmatpush.msra.mxu0 0.0
        %488 = vmatpush.msra.mxu0 0.0
        %489 = vmatpush.msra.mxu0 0.0
        %490 = vmatpush.msra.mxu0 0.0
        %491 = vmatpush.msra.mxu0 0.0
        %492 = vmatpush.msra.mxu0 0.0
        %493 = vmatpush.msra.mxu0 0.0
        %494 = vmatpush.msra.mxu0 0.0
        %495 = vmatpush.msra.mxu0 0.0
        %496 = vmatpush.msra.mxu0 0.0
        %497 = vmatpush.msra.mxu0 0.0
        %498 = vmatpush.msra.mxu0 0.0
        %499 = vmatpush.msra.mxu0 0.0
        %500 = vmatpush.msra.mxu0 0.0
        %501 = vmatpush.msra.mxu0 0.0
        %502 = vmatpush.msra.mxu0 %v482
        %503 = vmatmul.f32.gmra.mxu0 %v485
        %v504 = vpop.f32.mrf.mxu0
        %v505 = vadd.f32 0.0, %v504
        %506 = vdwg.mxu0
        %507 = vrot.lane.b32.xlu0 %v372, 112
        %v508 = vpop.permute.xlu0 %507
        %509 = vrot.lane.b32.xlu0 %v373, 112
        %v510 = vpop.permute.xlu0 %509
        %v511 = vsel %vm375, %v508, 0
        %v513 = vsel %vm375, %v510, 0
        %515 = vmatpush.xpose.msra.mxu0 0.0
        %516 = vmatpush.xpose.msra.mxu0 0.0
        %517 = vmatpush.xpose.msra.mxu0 0.0
        %518 = vmatpush.xpose.msra.mxu0 0.0
        %519 = vmatpush.xpose.msra.mxu0 0.0
        %520 = vmatpush.xpose.msra.mxu0 0.0
        %521 = vmatpush.xpose.msra.mxu0 0.0
        %522 = vmatpush.xpose.msra.mxu0 0.0
        %523 = vmatpush.xpose.msra.mxu0 0.0
        %524 = vmatpush.xpose.msra.mxu0 0.0
        %525 = vmatpush.xpose.msra.mxu0 0.0
        %526 = vmatpush.xpose.msra.mxu0 0.0
        %527 = vmatpush.xpose.msra.mxu0 0.0
        %528 = vmatpush.xpose.msra.mxu0 0.0
        %529 = vmatpush.xpose.msra.mxu0 0.0
        %530 = vmatpush.xpose.msra.mxu0 %v513
        %531 = vmatmul.f32.gmra.mxu0 %v511
        %v532 = vpop.f32.mrf.mxu0
        %v533 = vadd.f32 0.0, %v532
        %534 = vdwg.mxu0
        %v535 = vmul.f32 %v533, 0.35355338
        %v536 = vsel %vm375, %v535, -inf
        %537 = vmax.xlane.f32.xlu0 %v536
        %v538 = vpop.xlane.xlu0 %537
        %v539 = vsub.f32 %v535, %v538
        %v540 = vmul.f32 %v539, 1.442695
        %v541 = vpow.pop %v540
        %v542 = vsel %vm375, %v541, 0.0
        %543 = vadd.xlane.f32.xlu0 %v542
        %v544 = vpop.xlane.xlu0 %543
        %v545 = vrcp.pop %v544
        %v546 = vmul.f32 %v541, %v545
        %s547 = scalar_lea.vmem %s371, 16 [#allocation11]
        %548 = vst.msk [vmem:[%s547] sm:$0xff] %vm375, %v546
        %549 = vrot.lane.b32.xlu0 %v374, 112
        %v550 = vpop.permute.xlu0 %549
        %v553 = vsel %vm375, %v546, 0
        %555 = vmatpush.msra.mxu0 0.0
        %556 = vmatpush.msra.mxu0 0.0
        %557 = vmatpush.msra.mxu0 0.0
        %558 = vmatpush.msra.mxu0 0.0
        %559 = vmatpush.msra.mxu0 0.0
        %560 = vmatpush.msra.mxu0 0.0
        %561 = vmatpush.msra.mxu0 0.0
        %562 = vmatpush.msra.mxu0 0.0
        %563 = vmatpush.msra.mxu0 0.0
        %564 = vmatpush.msra.mxu0 0.0
        %565 = vmatpush.msra.mxu0 0.0
        %566 = vmatpush.msra.mxu0 0.0
        %567 = vmatpush.msra.mxu0 0.0
        %568 = vmatpush.msra.mxu0 0.0
        %569 = vmatpush.msra.mxu0 0.0
        %570 = vmatpush.msra.mxu0 %v550
        %571 = vmatmul.f32.gmra.mxu0 %v553
        %v572 = vpop.f32.mrf.mxu0
        %v573 = vadd.f32 0.0, %v572
        %574 = vdwg.mxu0
        %575 = vrot.lane.b32.xlu0 %v372, 104
        %v576 = vpop.permute.xlu0 %575
        %577 = vrot.lane.b32.xlu0 %v373, 104
        %v578 = vpop.permute.xlu0 %577
        %v579 = vsel %vm375, %v576, 0
        %v581 = vsel %vm375, %v578, 0
        %583 = vmatpush.xpose.msra.mxu0 0.0
        %584 = vmatpush.xpose.msra.mxu0 0.0
        %585 = vmatpush.xpose.msra.mxu0 0.0
        %586 = vmatpush.xpose.msra.mxu0 0.0
        %587 = vmatpush.xpose.msra.mxu0 0.0
        %588 = vmatpush.xpose.msra.mxu0 0.0
        %589 = vmatpush.xpose.msra.mxu0 0.0
        %590 = vmatpush.xpose.msra.mxu0 0.0
        %591 = vmatpush.xpose.msra.mxu0 0.0
        %592 = vmatpush.xpose.msra.mxu0 0.0
        %593 = vmatpush.xpose.msra.mxu0 0.0
        %594 = vmatpush.xpose.msra.mxu0 0.0
        %595 = vmatpush.xpose.msra.mxu0 0.0
        %596 = vmatpush.xpose.msra.mxu0 0.0
        %597 = vmatpush.xpose.msra.mxu0 0.0
        %598 = vmatpush.xpose.msra.mxu0 %v581
        %599 = vmatmul.f32.gmra.mxu0 %v579
        %v600 = vpop.f32.mrf.mxu0
        %v601 = vadd.f32 0.0, %v600
        %602 = vdwg.mxu0
        %v603 = vmul.f32 %v601, 0.35355338
        %v604 = vsel %vm375, %v603, -inf
        %605 = vmax.xlane.f32.xlu0 %v604
        %v606 = vpop.xlane.xlu0 %605
        %v607 = vsub.f32 %v603, %v606
        %v608 = vmul.f32 %v607, 1.442695
        %v609 = vpow.pop %v608
        %v610 = vsel %vm375, %v609, 0.0
        %611 = vadd.xlane.f32.xlu0 %v610
        %v612 = vpop.xlane.xlu0 %611
        %v613 = vrcp.pop %v612
        %v614 = vmul.f32 %v609, %v613
        %s615 = scalar_lea.vmem %s371, 24 [#allocation11]
        %616 = vst.msk [vmem:[%s615] sm:$0xff] %vm375, %v614
        %617 = vrot.lane.b32.xlu0 %v374, 104
        %v618 = vpop.permute.xlu0 %617
        %v621 = vsel %vm375, %v614, 0
        %623 = vmatpush.msra.mxu0 0.0
        %624 = vmatpush.msra.mxu0 0.0
        %625 = vmatpush.msra.mxu0 0.0
        %626 = vmatpush.msra.mxu0 0.0
        %627 = vmatpush.msra.mxu0 0.0
        %628 = vmatpush.msra.mxu0 0.0
        %629 = vmatpush.msra.mxu0 0.0
        %630 = vmatpush.msra.mxu0 0.0
        %631 = vmatpush.msra.mxu0 0.0
        %632 = vmatpush.msra.mxu0 0.0
        %633 = vmatpush.msra.mxu0 0.0
        %634 = vmatpush.msra.mxu0 0.0
        %635 = vmatpush.msra.mxu0 0.0
        %636 = vmatpush.msra.mxu0 0.0
        %637 = vmatpush.msra.mxu0 0.0
        %638 = vmatpush.msra.mxu0 %v618
        %639 = vmatmul.f32.gmra.mxu0 %v621
        %v640 = vpop.f32.mrf.mxu0
        %v641 = vadd.f32 0.0, %v640
        %642 = vdwg.mxu0
        %644 = vrot.lane.b32.xlu0 %v505, 8
        %v645 = vpop.permute.xlu0 %644
        %648 = vrot.lane.b32.xlu0 %v573, 16
        %v649 = vpop.permute.xlu0 %648
        %652 = vrot.lane.b32.xlu0 %v641, 24
        %v653 = vpop.permute.xlu0 %652
        %v655 = vsel %vm375, %v436, %v645
        %vm656 = vcmask 130048
        %v657 = vsel %vm656, %v655, %v649
        %vm658 = vcmask 195584
        %v659 = vsel %vm658, %v657, %v653
        %v660 = vld [vmem:[#allocation8] sm:$0xff]
        %v661 = vld [vmem:[#allocation8 + $0x8] sm:$0xff]
        %v662 = vld [vmem:[#allocation8 + $0x10] sm:$0xff]
        %v663 = vld [vmem:[#allocation8 + $0x18] sm:$0xff]
        %v664 = vld [vmem:[%s4] sm:$0x1]
        %v666 = vperm.slane %v664, 0
        %vm668 = vcmask 261120
        %v670 = vsel %vm668, %v659, 0
        %672 = vmatpush.msra.mxu0 0.0
        %673 = vmatpush.msra.mxu0 0.0
        %674 = vmatpush.msra.mxu0 0.0
        %675 = vmatpush.msra.mxu0 0.0
        %676 = vmatpush.msra.mxu0 0.0
        %677 = vmatpush.msra.mxu0 0.0
        %678 = vmatpush.msra.mxu0 0.0
        %679 = vmatpush.msra.mxu0 0.0
        %680 = vmatpush.msra.mxu0 0.0
        %681 = vmatpush.msra.mxu0 0.0
        %682 = vmatpush.msra.mxu0 0.0
        %683 = vmatpush.msra.mxu0 0.0
        %684 = vmatpush.msra.mxu0 %v663
        %685 = vmatpush.msra.mxu0 %v662
        %686 = vmatpush.msra.mxu0 %v661
        %687 = vmatpush.msra.mxu0 %v660
        %688 = vmatmul.f32.gmra.mxu0 %v670
        %v689 = vpop.f32.mrf.mxu0
        %v690 = vadd.f32 %v666, %v689
        %691 = vdwg.mxu0
        %692 = vst.msk [vmem:[%s364] sm:$0xff] %vm668, %v690
        %s693 = sand.u32 %s159, 1
        %s694 = scalar_lea.sflag [#allocation4], %s693
        %s695 = sand.u32 %s159, 1
        %s696 = smul.addr %s695, 8
        %s697 = scalar_lea.vmem [#allocation10], %s696
        %s698 = sand.u32 %s185, 1
        %s699 = scalar_lea.sflag [#allocation12], %s698
        %s700 = sand.u32 %s185, 1
        %s701 = smul.addr %s700, 32
        %s702 = scalar_lea.vmem [#allocation11], %s701
        // Predicated region
        $region57: #{tpu_custom_call.1} parent=39 // pred_check
          %p703 = pneg %p169
        $region58: #{tpu_custom_call.1} parent=39 // pred_check_branch
          %705 = sbr.rel (%p703) target = $region60
        $region59: #{tpu_custom_call.1} parent=39 // pred_region
          %707 = vsyncadd %s694, 0
          %s708 = smul.addr %s31, 8
          %s709 = scalar_lea.hbm %s5, %s708
          %s711 = sshll.u32 %s697, 4
          %s712 = int_to_ptr.vmem [resolvable:$true] %s711
          %s713 = sshll.u32 %s709, 4
          %s714 = int_to_ptr.hbm [resolvable:$true] %s713
          %716 = dma.vmem_to_hbm [thread:$0]  %s712, 128, %s714, %s694
        $region60: #{tpu_custom_call.1} parent=39 // pred_fallthru
          _
        // Predicated region
        $region61: #{tpu_custom_call.1} parent=39 // pred_check
          %p717 = pneg %p195
        $region62: #{tpu_custom_call.1} parent=39 // pred_check_branch
          %719 = sbr.rel (%p717) target = $region64
        $region63: #{tpu_custom_call.1} parent=39 // pred_region
          %721 = vsyncadd %s699, 0
          %s722 = smul.addr %s31, 4
          %s723 = smul.addr %s722, 8
          %s724 = scalar_lea.hbm %s6, %s723
          %s725 = sshll.u32 %s702, 4
          %s726 = int_to_ptr.vmem [resolvable:$true] %s725
          %s727 = sshll.u32 %s724, 4
          %s728 = int_to_ptr.hbm [resolvable:$true] %s727
          %733 = dma.vmem_to_hbm [thread:$0]  %s726, 512, %s728, %s699, 128, 128, 8
        $region64: #{tpu_custom_call.1} parent=39 // pred_fallthru
          _
      $region40: #{tpu_custom_call.1} parent=5 // pred_fallthru
        _
      %p734 = scmp.le.s32.totalorder 2, %s26
      // Predicated region
      $region65: #{tpu_custom_call.1} parent=5 // pred_check
        %p735 = pneg %p734
      $region66: #{tpu_custom_call.1} parent=5 // pred_check_branch
        %737 = sbr.rel (%p735) target = $region68
      $region67: #{tpu_custom_call.1} parent=5 // pred_region
        %s738 = ssub.s32 %s26, 2
        // Predicated region
        $region69: #{tpu_custom_call.1} parent=67 // pred_check
          %p739 = pneg %p175
        $region70: #{tpu_custom_call.1} parent=67 // pred_check_branch
          %741 = sbr.rel (%p739) target = $region72
        $region71: #{tpu_custom_call.1} parent=67 // pred_region
          %s742 = sand.u32 %s160, 1
          %s743 = scalar_lea.sflag [#allocation4], %s742
          %s744 = sand.u32 %s160, 1
          %s745 = smul.addr %s744, 8
          %s746 = scalar_lea.vmem [#allocation10], %s745
          %748 = dma.done %s743, 128
        $region72: #{tpu_custom_call.1} parent=67 // pred_fallthru
          _
        // Predicated region
        $region73: #{tpu_custom_call.1} parent=67 // pred_check
          %p749 = pneg %p201
        $region74: #{tpu_custom_call.1} parent=67 // pred_check_branch
          %751 = sbr.rel (%p749) target = $region76
        $region75: #{tpu_custom_call.1} parent=67 // pred_region
          %s752 = sand.u32 %s186, 1
          %s753 = scalar_lea.sflag [#allocation12], %s752
          %s754 = sand.u32 %s186, 1
          %s755 = smul.addr %s754, 32
          %s756 = scalar_lea.vmem [#allocation11], %s755
          %758 = dma.done %s753, 512
        $region76: #{tpu_custom_call.1} parent=67 // pred_fallthru
          _
      $region68: #{tpu_custom_call.1} parent=5 // pred_fallthru
        _
    $region6: #{tpu_custom_call.1} parent=1 // loop_footer
      %s30 = sadd.s32 1, %s26
    $region7: #{tpu_custom_call.1} parent=1 // loop_footer_branch
      %25 = sbr.rel target = $region3
    $region8: #{tpu_custom_call.1} parent=1 // loop_exit
      _
    %759 = vsyncpa [#allocation3], 1
    %s760 = scalar_lea.sflag [#allocation3], 1
    %761 = vsyncpa %s760, 1
    %762 = vsyncpa [#allocation6], 1
    %s763 = scalar_lea.sflag [#allocation6], 1
    %764 = vsyncpa %s763, 1
    %765 = vsyncpa [#allocation9], 1
    %766 = vsyncpa [#allocation4], 1
    %s767 = scalar_lea.sflag [#allocation4], 1
    %768 = vsyncpa %s767, 1
    %769 = vsyncpa [#allocation12], 1
    %s770 = scalar_lea.sflag [#allocation12], 1
    %771 = vsyncpa %s770, 1

</llo_original>
